<compile_context>
chip_gen: v7x
topology: tpu7x:2x2x1
jax: 0.10.0
libtpu: 0.0.40
codegen_flags: <defaults>
</compile_context>

<pallas_src>
import functools

import jax
import jax.numpy as jnp
from jax import lax
from jax.experimental import pallas as pl
from jax.experimental.pallas import tpu as pltpu


def _round_up(x, m):
    return ((x + m - 1) // m) * m


def _attn_kernel(q_ref, k_ref, v_ref, w_ref, b_ref, weights_ref, out_ref,
                 *, lk, lk_pad):
    # q_ref: (1, TQ, Dp)   k_ref: (1, Lkp, Dp)   v_ref: (1, Lkp, Dvp)
    # w_ref: (Dp, Dp)      b_ref: (1,) f32 in SMEM
    q = q_ref[0]                     # (TQ, Dp)
    k = k_ref[0]                     # (Lkp, Dp)
    v = v_ref[0]                     # (Lkp, Dvp)
    w = w_ref[...]                   # (Dp, Dp)
    bias = b_ref[0]                  # scalar (SMEM)

    # query @ W  (MXU, contraction depth Dp is a multiple of 128)
    qw = jnp.dot(q, w, preferred_element_type=jnp.float32)              # (TQ, Dp)

    # (query @ W) @ key^T without materializing the transpose: contract the
    # last dim of both operands so the MXU consumes k directly (no XLU pass).
    scores = lax.dot_general(
        qw, k, dimension_numbers=(((1,), (1,)), ((), ())),
        preferred_element_type=jnp.float32)                             # (TQ, Lkp)
    scores = jnp.tanh(scores + bias)

    # Softmax over keys.  tanh bounds scores to [-1, 1], so exp() is safe
    # without the usual max-subtraction (saves a cross-lane XLU reduce).
    e = jnp.exp(scores)
    if lk_pad > lk:
        # Zero out padded key columns so they don't pollute the denominator.
        col = lax.broadcasted_iota(jnp.int32, e.shape, 1)
        e = jnp.where(col < lk, e, 0.0)
    denom = jnp.sum(e, axis=-1, keepdims=True)                          # (TQ, 1)
    r = pl.reciprocal(denom, approx=True)                               # EUP slot
    r = r * (2.0 - denom * r)                                           # Newton step -> f32 accuracy
    wts = e * r

    weights_ref[0] = wts.astype(weights_ref.dtype)
    out_ref[0] = jnp.dot(wts, v,
                         preferred_element_type=jnp.float32).astype(out_ref.dtype)


def _choose_tile_q(lq, lk_pad, d_pad, dv_pad, budget_bytes=12 * 1024 * 1024):
    """Largest query tile whose double-buffered f32 working set fits the budget."""
    fixed = (lk_pad * d_pad + lk_pad * dv_pad + d_pad * d_pad) * 4 * 2   # k, v, W
    lq8 = _round_up(lq, 8)
    for tq in (512, 256, 128, 64, 32, 16, 8):
        if tq > lq8:
            continue
        per_q = (tq * d_pad + tq * lk_pad + tq * dv_pad) * 4 * 2         # q, weights, out
        if fixed + per_q <= budget_bytes:
            return tq
    return 8


def attention_module(key, query, value, W, bias):
    """Pallas equivalent of AttentionModule.forward (dropout=None).

    key:   (B, Lk, D)
    query: (B, Lq, D)
    value: (B, Lk, Dv)
    W:     (D, D)
    bias:  (1,)
    returns (weights (B, Lq, Lk), output (B, Lq, Dv))
    """
    B, Lq, D = query.shape
    _, Lk, Dk = key.shape
    Dv = value.shape[-1]

    f32 = jnp.float32
    d_pad = _round_up(D, 128)
    lk_pad = _round_up(Lk, 128)
    dv_pad = _round_up(Dv, 128)
    tq = _choose_tile_q(Lq, lk_pad, d_pad, dv_pad)
    lq_pad = _round_up(Lq, tq)

    # Zero-padding is exact: padded D columns contribute 0 to the contractions,
    # padded key rows are masked out of the softmax inside the kernel, padded
    # query rows / value columns are sliced away below.
    q_p = jnp.pad(query.astype(f32), ((0, 0), (0, lq_pad - Lq), (0, d_pad - D)))
    k_p = jnp.pad(key.astype(f32), ((0, 0), (0, lk_pad - Lk), (0, d_pad - Dk)))
    v_p = jnp.pad(value.astype(f32), ((0, 0), (0, lk_pad - Lk), (0, dv_pad - Dv)))
    w_p = jnp.pad(W.astype(f32), ((0, d_pad - D), (0, d_pad - D)))
    b_s = bias.reshape((1,)).astype(f32)

    kernel = functools.partial(_attn_kernel, lk=Lk, lk_pad=lk_pad)

    grid_spec = pltpu.PrefetchScalarGridSpec(
        num_scalar_prefetch=0,
        grid=(B, lq_pad // tq),
        in_specs=[
            pl.BlockSpec((1, tq, d_pad), lambda b, i: (b, i, 0)),        # q tile
            pl.BlockSpec((1, lk_pad, d_pad), lambda b, i: (b, 0, 0)),    # k (resident over i)
            pl.BlockSpec((1, lk_pad, dv_pad), lambda b, i: (b, 0, 0)),   # v (resident over i)
            pl.BlockSpec((d_pad, d_pad), lambda b, i: (0, 0)),           # W (resident)
            pl.BlockSpec(memory_space=pltpu.MemorySpace.SMEM),           # bias scalar
        ],
        out_specs=[
            pl.BlockSpec((1, tq, lk_pad), lambda b, i: (b, i, 0)),       # weights tile
            pl.BlockSpec((1, tq, dv_pad), lambda b, i: (b, i, 0)),       # output tile
        ],
    )

    weights_p, out_p = pl.pallas_call(
        kernel,
        grid_spec=grid_spec,
        out_shape=(
            jax.ShapeDtypeStruct((B, lq_pad, lk_pad), f32),
            jax.ShapeDtypeStruct((B, lq_pad, dv_pad), f32),
        ),
        compiler_params=pltpu.CompilerParams(
            dimension_semantics=("parallel", "parallel"),
            vmem_limit_bytes=32 * 1024 * 1024,
        ),
    )(q_p, k_p, v_p, w_p, b_s)

    return weights_p[:, :Lq, :Lk], out_p[:, :Lq, :Dv]


def _reference(key, query, value, W, bias):
    qwk = jnp.einsum("bqd,de,bke->bqk", query, W, key)
    s = jnp.tanh(qwk + bias[0])
    w = jax.nn.softmax(s, axis=-1)
    return w, jnp.einsum("bqk,bkv->bqv", w, value)


if __name__ == "__main__":
    # Small shapes consistent with the module: batch=2, seq=8, d_model=32.
    B, Lq, Lk, D = 2, 8, 8, 32
    rng = jax.random.PRNGKey(0)
    k0, k1, k2, k3, k4 = jax.random.split(rng, 5)

    key_in = jax.random.normal(k0, (B, Lk, D), dtype=jnp.float32)
    query_in = jax.random.normal(k1, (B, Lq, D), dtype=jnp.float32)
    value_in = jax.random.normal(k2, (B, Lk, D), dtype=jnp.float32)
    # Deterministic "randn"-style parameter init (nn.Parameter(torch.randn(...)))
    W = jax.random.normal(k3, (D, D), dtype=jnp.float32)
    bias = jax.random.normal(k4, (1,), dtype=jnp.float32)

    weights, out = attention_module(key_in, query_in, value_in, W, bias)
    jax.block_until_ready((weights, out))

    ref_w, ref_o = _reference(key_in, query_in, value_in, W, bias)
    assert jnp.allclose(weights, ref_w, atol=1e-5, rtol=1e-5)
    assert jnp.allclose(out, ref_o, atol=1e-5, rtol=1e-5)

    # TODO(synk): dropout path (self.dropout) is omitted — module default is dropout=None.
    print("KERNEL_OK")
</pallas_src>

<mosaic_0001>
module attributes {stable_mosaic.version = 11 : i64} {
  func.func @_attn_kernel(%arg0: i32, %arg1: i32, %arg2: memref<1x8x128xf32, #tpu.memory_space<vmem>>, %arg3: memref<1x128x128xf32, #tpu.memory_space<vmem>>, %arg4: memref<1x128x128xf32, #tpu.memory_space<vmem>>, %arg5: memref<128x128xf32, #tpu.memory_space<vmem>>, %arg6: memref<1xf32, #tpu.memory_space<smem>>, %arg7: memref<1x8x128xf32, #tpu.memory_space<vmem>>, %arg8: memref<1x8x128xf32, #tpu.memory_space<vmem>>) attributes {dimension_semantics = [#tpu.dimension_semantics<parallel>, #tpu.dimension_semantics<parallel>], iteration_bounds = array<i64: 2, 1>, scalar_prefetch = 0 : i64, scratch_operands = 0 : i64, tpu.core_type = #tpu.core_type<tc>, window_params = [{transform_indices = @transform_0, window_bounds = array<i64: 1, 8, 128>}, {transform_indices = @transform_1, window_bounds = array<i64: 1, 128, 128>}, {transform_indices = @transform_2, window_bounds = array<i64: 1, 128, 128>}, {pipeline_mode = #tpu.pipeline_mode<synchronous>, transform_indices = @transform_3, window_bounds = array<i64: 128, 128>}, {transform_indices = @transform_4, window_bounds = array<i64: 1>}, {transform_indices = @transform_5, window_bounds = array<i64: 1, 8, 128>}, {transform_indices = @transform_6, window_bounds = array<i64: 1, 8, 128>}]} {
    %c0 = arith.constant 0 : index
    %c0_0 = arith.constant 0 : index
    %c0_1 = arith.constant 0 : index
    %0 = vector.load %arg2[%c0, %c0_0, %c0_1] : memref<1x8x128xf32, #tpu.memory_space<vmem>>, vector<1x8x128xf32>
    %1 = vector.shape_cast %0 : vector<1x8x128xf32> to vector<8x128xf32>
    %c0_2 = arith.constant 0 : index
    %c0_3 = arith.constant 0 : index
    %c0_4 = arith.constant 0 : index
    %2 = vector.load %arg3[%c0_2, %c0_3, %c0_4] : memref<1x128x128xf32, #tpu.memory_space<vmem>>, vector<1x128x128xf32>
    %3 = vector.shape_cast %2 : vector<1x128x128xf32> to vector<128x128xf32>
    %c0_5 = arith.constant 0 : index
    %c0_6 = arith.constant 0 : index
    %c0_7 = arith.constant 0 : index
    %4 = vector.load %arg4[%c0_5, %c0_6, %c0_7] : memref<1x128x128xf32, #tpu.memory_space<vmem>>, vector<1x128x128xf32>
    %5 = vector.shape_cast %4 : vector<1x128x128xf32> to vector<128x128xf32>
    %c0_8 = arith.constant 0 : index
    %c0_9 = arith.constant 0 : index
    %6 = vector.load %arg5[%c0_8, %c0_9] : memref<128x128xf32, #tpu.memory_space<vmem>>, vector<128x128xf32>
    %c0_10 = arith.constant 0 : index
    %7 = memref.load %arg6[%c0_10] : memref<1xf32, #tpu.memory_space<smem>>
    %cst = arith.constant dense<0.000000e+00> : vector<8x128xf32>
    %8 = tpu.matmul %1, %6, %cst {dimension_numbers = #tpu.dot_dimension_numbers<[1], [0], [0], [1], [0, 0, 1, 1], [], []>} : vector<8x128xf32>, vector<128x128xf32>, vector<8x128xf32> -> vector<8x128xf32>
    %cst_11 = arith.constant dense<0.000000e+00> : vector<8x128xf32>
    %9 = tpu.matmul %8, %3, %cst_11 {dimension_numbers = #tpu.dot_dimension_numbers<[1], [1], [0], [0], [0, 0, 1, 0], [], []>} : vector<8x128xf32>, vector<128x128xf32>, vector<8x128xf32> -> vector<8x128xf32>
    %10 = vector.broadcast %7 : f32 to vector<8x128xf32>
    %11 = arith.addf %9, %10 : vector<8x128xf32>
    %12 = math.tanh %11 : vector<8x128xf32>
    %13 = math.exp %12 : vector<8x128xf32>
    %14 = tpu.iota {dimensions = array<i32: 1>} : vector<8x128xi32>
    %c8_i32 = arith.constant 8 : i32
    %15 = vector.broadcast %c8_i32 : i32 to vector<8x128xi32>
    %16 = arith.cmpi slt, %14, %15 : vector<8x128xi32>
    %cst_12 = arith.constant 0.000000e+00 : f32
    %17 = vector.broadcast %cst_12 : f32 to vector<8x128xf32>
    %18 = arith.select %16, %13, %17 : vector<8x128xi1>, vector<8x128xf32>
    %cst_13 = arith.constant dense<0.000000e+00> : vector<8xf32>
    %19 = vector.multi_reduction <add>, %18, %cst_13 [1] : vector<8x128xf32> to vector<8xf32>
    %20 = vector.shape_cast %19 : vector<8xf32> to vector<8x1xf32>
    %21 = tpu.reciprocal %20 {approx = true} : vector<8x1xf32> -> vector<8x1xf32>
    %22 = arith.mulf %20, %21 : vector<8x1xf32>
    %cst_14 = arith.constant 2.000000e+00 : f32
    %23 = vector.broadcast %cst_14 : f32 to vector<8x1xf32>
    %24 = arith.subf %23, %22 : vector<8x1xf32>
    %25 = arith.mulf %21, %24 : vector<8x1xf32>
    %26 = vector.broadcast %25 : vector<8x1xf32> to vector<8x128xf32>
    %27 = arith.mulf %18, %26 : vector<8x128xf32>
    %c0_15 = arith.constant 0 : index
    %c0_16 = arith.constant 0 : index
    %c0_17 = arith.constant 0 : index
    %28 = vector.load %arg7[%c0_15, %c0_16, %c0_17] : memref<1x8x128xf32, #tpu.memory_space<vmem>>, vector<1x8x128xf32>
    %29 = vector.shape_cast %28 : vector<1x8x128xf32> to vector<8x128xf32>
    %30 = vector.shape_cast %27 : vector<8x128xf32> to vector<1x8x128xf32>
    tpu.vector_store %arg7[%c0_15, %c0_16, %c0_17], %30 {strides = array<i32>} : memref<1x8x128xf32, #tpu.memory_space<vmem>>, vector<1x8x128xf32>,
    %cst_18 = arith.constant dense<0.000000e+00> : vector<8x128xf32>
    %31 = tpu.matmul %27, %5, %cst_18 {dimension_numbers = #tpu.dot_dimension_numbers<[1], [0], [0], [1], [0, 0, 1, 1], [], []>} : vector<8x128xf32>, vector<128x128xf32>, vector<8x128xf32> -> vector<8x128xf32>
    %c0_19 = arith.constant 0 : index
    %c0_20 = arith.constant 0 : index
    %c0_21 = arith.constant 0 : index
    %32 = vector.load %arg8[%c0_19, %c0_20, %c0_21] : memref<1x8x128xf32, #tpu.memory_space<vmem>>, vector<1x8x128xf32>
    %33 = vector.shape_cast %32 : vector<1x8x128xf32> to vector<8x128xf32>
    %34 = vector.shape_cast %31 : vector<8x128xf32> to vector<1x8x128xf32>
    tpu.vector_store %arg8[%c0_19, %c0_20, %c0_21], %34 {strides = array<i32>} : memref<1x8x128xf32, #tpu.memory_space<vmem>>, vector<1x8x128xf32>,
    return
  }
  func.func @transform_0(%arg0: i32, %arg1: i32) -> (i32, i32, i32) {
    %c0_i32 = arith.constant 0 : i32
    %c0_i32_0 = arith.constant 0 : i32
    return %arg0, %arg1, %c0_i32 : i32, i32, i32
  }
  func.func @transform_1(%arg0: i32, %arg1: i32) -> (i32, i32, i32) {
    %c0_i32 = arith.constant 0 : i32
    %c0_i32_0 = arith.constant 0 : i32
    %c0_i32_1 = arith.constant 0 : i32
    return %arg0, %c0_i32, %c0_i32_0 : i32, i32, i32
  }
  func.func @transform_2(%arg0: i32, %arg1: i32) -> (i32, i32, i32) {
    %c0_i32 = arith.constant 0 : i32
    %c0_i32_0 = arith.constant 0 : i32
    %c0_i32_1 = arith.constant 0 : i32
    return %arg0, %c0_i32, %c0_i32_0 : i32, i32, i32
  }
  func.func @transform_3(%arg0: i32, %arg1: i32) -> (i32, i32) {
    %c0_i32 = arith.constant 0 : i32
    %c0_i32_0 = arith.constant 0 : i32
    %c0_i32_1 = arith.constant 0 : i32
    return %c0_i32, %c0_i32_0 : i32, i32
  }
  func.func @transform_4(%arg0: i32, %arg1: i32) -> i32 {
    %c0_i32 = arith.constant 0 : i32
    %c0_i32_0 = arith.constant 0 : i32
    return %c0_i32 : i32
  }
  func.func @transform_5(%arg0: i32, %arg1: i32) -> (i32, i32, i32) {
    %c0_i32 = arith.constant 0 : i32
    %c0_i32_0 = arith.constant 0 : i32
    return %arg0, %arg1, %c0_i32 : i32, i32, i32
  }
  func.func @transform_6(%arg0: i32, %arg1: i32) -> (i32, i32, i32) {
    %c0_i32 = arith.constant 0 : i32
    %c0_i32_0 = arith.constant 0 : i32
    return %arg0, %arg1, %c0_i32 : i32, i32, i32
  }
}

</mosaic_0001>

<llo_original>
// kernel: tpu_custom_call.1
$region0: #{tpu_custom_call.1}
  #allocation0 [shape = 'u32[]', space=smem, size = 0x4, offset = 0x4, fixed_abs, tag = 'smem constant byte address 0x4 - core index']
  #allocation1 [shape = 'u32[144,128]{1,0:T(1,128)}', space=vmem, size = 0x12000, scoped, tag = 'internal scratch']
  #allocation2 [shape = 'f32[1]{0:T(128)S(6)}', space=smem, size = 0x200, scoped, tag = 'scoped memory for tpu_custom_call.1']
  %s0 = inlined_call_operand.hbm [shape: f32[2,8,128], index: 0, kind: input, shape index: {}]
  %s1 = inlined_call_operand.hbm [shape: f32[2,128,128], index: 1, kind: input, shape index: {}]
  %s2 = inlined_call_operand.hbm [shape: f32[2,128,128], index: 2, kind: input, shape index: {}]
  %s3 = inlined_call_operand.hbm [shape: f32[128,128], index: 3, kind: input, shape index: {}]
  %s4 = inlined_call_operand.<no memory space> [shape: f32[1], index: 4, kind: input, shape index: {}]
  %s5 = inlined_call_operand.hbm [shape: f32[2,8,128], index: 5, kind: output, shape index: {0}]
  %s6 = inlined_call_operand.hbm [shape: f32[2,8,128], index: 6, kind: output, shape index: {1}]
  %7 = xla_tuple %s5, %s6
  %s8 = sld [smem:[#allocation0]]
  $region77: #{tpu_custom_call.1} parent=0
    _
  %s10 = ssub.s32 1, %s8
  %s11 = scalar_select 0, %s10, %s8
  %12 = sst [smem:[#allocation2]] %s4
  $region1: #{tpu_custom_call.1} parent=0
    #allocation3 [shape = 'u8[8192]{0}', space=vmem, size = 0x2000, scoped, tag = 'input window, operand 0']
    #allocation4 [shape = 's32[2]{0}', space=sflag, size = 0x8, scoped, tag = 'scoped memory for tpu_custom_call.1']
    #allocation5 [shape = 's32[2]{0}', space=sflag, size = 0x8, scoped, tag = 'scoped memory for tpu_custom_call.1']
    #allocation6 [shape = 'u8[131072]{0}', space=vmem, size = 0x20000, scoped, tag = 'input window, operand 1']
    #allocation7 [shape = 's32[2]{0}', space=sflag, size = 0x8, scoped, tag = 'scoped memory for tpu_custom_call.1']
    #allocation8 [shape = 'u8[131072]{0}', space=vmem, size = 0x20000, scoped, tag = 'input window, operand 2']
    #allocation9 [shape = 'u8[65536]{0}', space=vmem, size = 0x10000, scoped, tag = 'input window, operand 3, single buffered']
    #allocation10 [shape = 's32[1]{0}', space=sflag, size = 0x4, scoped, tag = 'scoped memory for tpu_custom_call.1']
    #allocation11 [shape = 'u8[8192]{0}', space=vmem, size = 0x2000, scoped, tag = 'output window, operand 0']
    #allocation12 [shape = 'u8[8192]{0}', space=vmem, size = 0x2000, scoped, tag = 'output window, operand 1']
    #allocation13 [shape = 's32[2]{0}', space=sflag, size = 0x8, scoped, tag = 'scoped memory for tpu_custom_call.1']
    %13 = vsyncpa [#allocation4], 0
    %s14 = scalar_lea.sflag [#allocation4], 1
    %15 = vsyncpa %s14, 0
    %16 = vsyncpa [#allocation7], 0
    %s17 = scalar_lea.sflag [#allocation7], 1
    %18 = vsyncpa %s17, 0
    %19 = vsyncpa [#allocation10], 0
    %20 = vsyncpa [#allocation5], 0
    %s21 = scalar_lea.sflag [#allocation5], 1
    %22 = vsyncpa %s21, 0
    %23 = vsyncpa [#allocation13], 0
    %s24 = scalar_lea.sflag [#allocation13], 1
    %25 = vsyncpa %s24, 0
    loop: start=0, step=1, limit=4
    $region2: #{tpu_custom_call.1} parent=1 // loop_pre_header
      _
    $region3: #{tpu_custom_call.1} parent=1 // loop_header
      %s27 = sphi 0, %s31
      %p28 = scmp.ge.s32.totalorder %s27, 4
      %s34 = sphi 0, %s46
      %s35 = sphi 0, %s42
      %s36 = sphi 0, %s34
      %s37 = sphi 0, %s35
      %s38 = sphi 0, %s36
      %s39 = sphi 0, %s37
      %s51 = sphi 0, %s53
      %s54 = sphi 0, %s51
      %s55 = sphi 0, %s54
      %s71 = sphi 0, %s55
      %s77 = sphi 0, %s79
      %s80 = sphi 0, %s77
      %s81 = sphi 0, %s80
      %s97 = sphi 0, %s81
      %s103 = sphi 0, %s105
      %s106 = sphi 0, %s103
      %s107 = sphi 0, %s106
      %s123 = sphi 0, %s107
      %s127 = sphi 0, %s127
      %s129 = sphi 0, %s127
      %s130 = sphi 0, %s129
      %s144 = sphi 0, %s130
      %s148 = sphi 0, %s148
      %s150 = sphi 0, %s148
      %s151 = sphi 0, %s150
      %s165 = sphi 0, %s151
      %s173 = sphi 0, %s175
      %s176 = sphi 0, %s173
      %s177 = sphi 0, %s176
      %s193 = sphi 0, %s177
      %s201 = sphi 0, %s203
      %s204 = sphi 0, %s201
      %s205 = sphi 0, %s204
      %s221 = sphi 0, %s205
    $region4: #{tpu_custom_call.1} parent=1 // loop_header_branch
      %30 = sbr.rel (%p28) target = $region8
    $region5: #{tpu_custom_call.1} parent=1 // loop_body
      %s32 = ssub.s32 %s27, 1
      %s33 = ssub.s32 %s27, 2
      %s40 = sadd.s32 1, %s35
      %p41 = scmp.ge.s32.totalorder %s40, 1
      %s42 = scalar_select %p41, 0, %s40
      %s43 = sadd.s32 1, %s34
      %s44 = scalar_select %p41, %s43, %s34
      %p45 = scmp.ge.s32.totalorder %s44, 2
      %s46 = scalar_select %p45, 0, %s44
      %s47 = ssub.s32 %s34, %s46
      %s48 = ssub.s32 %s35, %s42
      %s49 = sor.u32 %s47, %s48
      %p50 = scmp.eq.s32.totalorder %s49, 0
      %s52 = sadd.s32 %s51, 1
      %s53 = scalar_select %p50, %s51, %s52
      %p56 = pneg %p50
      %p57 = scmp.eq.s32.totalorder %s27, 1
      %p58 = por %p56, %p57
      %p59 = scmp.ne.s32.totalorder %s51, %s54
      %p60 = scmp.eq.s32.totalorder %s27, 0
      %p61 = por %p59, %p60
      %p62 = scmp.ne.s32.totalorder %s51, %s54
      %p63 = scmp.eq.s32.totalorder %s32, 1
      %p64 = por %p62, %p63
      %p65 = scmp.ne.s32.totalorder %s54, %s55
      %p66 = scmp.eq.s32.totalorder %s32, 0
      %p67 = por %p65, %p66
      %p68 = scmp.ne.s32.totalorder %s54, %s55
      %p69 = scmp.eq.s32.totalorder %s33, 1
      %p70 = por %p68, %p69
      %p72 = scmp.ne.s32.totalorder %s55, %s71
      %p73 = scmp.eq.s32.totalorder %s33, 0
      %p74 = por %p72, %p73
      %s75 = ssub.s32 %s34, %s46
      %p76 = scmp.eq.s32.totalorder %s75, 0
      %s78 = sadd.s32 %s77, 1
      %s79 = scalar_select %p76, %s77, %s78
      %p82 = pneg %p76
      %p83 = scmp.eq.s32.totalorder %s27, 1
      %p84 = por %p82, %p83
      %p85 = scmp.ne.s32.totalorder %s77, %s80
      %p86 = scmp.eq.s32.totalorder %s27, 0
      %p87 = por %p85, %p86
      %p88 = scmp.ne.s32.totalorder %s77, %s80
      %p89 = scmp.eq.s32.totalorder %s32, 1
      %p90 = por %p88, %p89
      %p91 = scmp.ne.s32.totalorder %s80, %s81
      %p92 = scmp.eq.s32.totalorder %s32, 0
      %p93 = por %p91, %p92
      %p94 = scmp.ne.s32.totalorder %s80, %s81
      %p95 = scmp.eq.s32.totalorder %s33, 1
      %p96 = por %p94, %p95
      %p98 = scmp.ne.s32.totalorder %s81, %s97
      %p99 = scmp.eq.s32.totalorder %s33, 0
      %p100 = por %p98, %p99
      %s101 = ssub.s32 %s34, %s46
      %p102 = scmp.eq.s32.totalorder %s101, 0
      %s104 = sadd.s32 %s103, 1
      %s105 = scalar_select %p102, %s103, %s104
      %p108 = pneg %p102
      %p109 = scmp.eq.s32.totalorder %s27, 1
      %p110 = por %p108, %p109
      %p111 = scmp.ne.s32.totalorder %s103, %s106
      %p112 = scmp.eq.s32.totalorder %s27, 0
      %p113 = por %p111, %p112
      %p114 = scmp.ne.s32.totalorder %s103, %s106
      %p115 = scmp.eq.s32.totalorder %s32, 1
      %p116 = por %p114, %p115
      %p117 = scmp.ne.s32.totalorder %s106, %s107
      %p118 = scmp.eq.s32.totalorder %s32, 0
      %p119 = por %p117, %p118
      %p120 = scmp.ne.s32.totalorder %s106, %s107
      %p121 = scmp.eq.s32.totalorder %s33, 1
      %p122 = por %p120, %p121
      %p124 = scmp.ne.s32.totalorder %s107, %s123
      %p125 = scmp.eq.s32.totalorder %s33, 0
      %p126 = por %p124, %p125
      %s128 = sadd.s32 %s127, 1
      %p131 = scmp.eq.s32.totalorder %s27, 1
      %p132 = scmp.ne.s32.totalorder %s127, %s129
      %p133 = scmp.eq.s32.totalorder %s27, 0
      %p134 = por %p132, %p133
      %p135 = scmp.ne.s32.totalorder %s127, %s129
      %p136 = scmp.eq.s32.totalorder %s32, 1
      %p137 = por %p135, %p136
      %p138 = scmp.ne.s32.totalorder %s129, %s130
      %p139 = scmp.eq.s32.totalorder %s32, 0
      %p140 = por %p138, %p139
      %p141 = scmp.ne.s32.totalorder %s129, %s130
      %p142 = scmp.eq.s32.totalorder %s33, 1
      %p143 = por %p141, %p142
      %p145 = scmp.ne.s32.totalorder %s130, %s144
      %p146 = scmp.eq.s32.totalorder %s33, 0
      %p147 = por %p145, %p146
      %s149 = sadd.s32 %s148, 1
      %p152 = scmp.eq.s32.totalorder %s27, 1
      %p153 = scmp.ne.s32.totalorder %s148, %s150
      %p154 = scmp.eq.s32.totalorder %s27, 0
      %p155 = por %p153, %p154
      %p156 = scmp.ne.s32.totalorder %s148, %s150
      %p157 = scmp.eq.s32.totalorder %s32, 1
      %p158 = por %p156, %p157
      %p159 = scmp.ne.s32.totalorder %s150, %s151
      %p160 = scmp.eq.s32.totalorder %s32, 0
      %p161 = por %p159, %p160
      %p162 = scmp.ne.s32.totalorder %s150, %s151
      %p163 = scmp.eq.s32.totalorder %s33, 1
      %p164 = por %p162, %p163
      %p166 = scmp.ne.s32.totalorder %s151, %s165
      %p167 = scmp.eq.s32.totalorder %s33, 0
      %p168 = por %p166, %p167
      %s169 = ssub.s32 %s34, %s46
      %s170 = ssub.s32 %s35, %s42
      %s171 = sor.u32 %s169, %s170
      %p172 = scmp.eq.s32.totalorder %s171, 0
      %s174 = sadd.s32 %s173, 1
      %s175 = scalar_select %p172, %s173, %s174
      %p178 = pneg %p172
      %p179 = scmp.eq.s32.totalorder %s27, 1
      %p180 = por %p178, %p179
      %p181 = scmp.ne.s32.totalorder %s173, %s176
      %p182 = scmp.eq.s32.totalorder %s27, 0
      %p183 = por %p181, %p182
      %p184 = scmp.ne.s32.totalorder %s173, %s176
      %p185 = scmp.eq.s32.totalorder %s32, 1
      %p186 = por %p184, %p185
      %p187 = scmp.ne.s32.totalorder %s176, %s177
      %p188 = scmp.eq.s32.totalorder %s32, 0
      %p189 = por %p187, %p188
      %p190 = scmp.ne.s32.totalorder %s176, %s177
      %p191 = scmp.eq.s32.totalorder %s33, 1
      %p192 = por %p190, %p191
      %p194 = scmp.ne.s32.totalorder %s177, %s193
      %p195 = scmp.eq.s32.totalorder %s33, 0
      %p196 = por %p194, %p195
      %s197 = ssub.s32 %s34, %s46
      %s198 = ssub.s32 %s35, %s42
      %s199 = sor.u32 %s197, %s198
      %p200 = scmp.eq.s32.totalorder %s199, 0
      %s202 = sadd.s32 %s201, 1
      %s203 = scalar_select %p200, %s201, %s202
      %p206 = pneg %p200
      %p207 = scmp.eq.s32.totalorder %s27, 1
      %p208 = por %p206, %p207
      %p209 = scmp.ne.s32.totalorder %s201, %s204
      %p210 = scmp.eq.s32.totalorder %s27, 0
      %p211 = por %p209, %p210
      %p212 = scmp.ne.s32.totalorder %s201, %s204
      %p213 = scmp.eq.s32.totalorder %s32, 1
      %p214 = por %p212, %p213
      %p215 = scmp.ne.s32.totalorder %s204, %s205
      %p216 = scmp.eq.s32.totalorder %s32, 0
      %p217 = por %p215, %p216
      %p218 = scmp.ne.s32.totalorder %s204, %s205
      %p219 = scmp.eq.s32.totalorder %s33, 1
      %p220 = por %p218, %p219
      %p222 = scmp.ne.s32.totalorder %s205, %s221
      %p223 = scmp.eq.s32.totalorder %s33, 0
      %p224 = por %p222, %p223
      %p225 = scmp.le.s32.totalorder 1, %s27
      %p226 = scmp.lt.s32.totalorder %s27, 3
      %p227 = pnand %p225, %p226
      %p228 = pneg %p227
      // Predicated region
      $region9: #{tpu_custom_call.1} parent=5 // pred_check
        _
      $region10: #{tpu_custom_call.1} parent=5 // pred_check_branch
        %230 = sbr.rel (%p227) target = $region12
      $region11: #{tpu_custom_call.1} parent=5 // pred_region
        %s231 = ssub.s32 %s27, 1
        // Predicated region
        $region13: #{tpu_custom_call.1} parent=11 // pred_check
          %p232 = pneg %p140
        $region14: #{tpu_custom_call.1} parent=11 // pred_check_branch
          %234 = sbr.rel (%p232) target = $region16
        $region15: #{tpu_custom_call.1} parent=11 // pred_region
          %s236 = ssub.s32 2048, 2048
          %237 = vsyncadd [#allocation10], %s236
          %s238 = sshll.u32 [#allocation9], 4
          %s239 = int_to_ptr.vmem [resolvable:$true] %s238
          %244 = dma.hbm_to_vmem [thread:$0]  %s3, 2048, %s239, [#allocation10], 128, 128, 8
        $region16: #{tpu_custom_call.1} parent=11 // pred_fallthru
          _
        // Predicated region
        $region17: #{tpu_custom_call.1} parent=11 // pred_check
          %p245 = pneg %p161
        $region18: #{tpu_custom_call.1} parent=11 // pred_check_branch
          %247 = sbr.rel (%p245) target = $region20
        $region19: #{tpu_custom_call.1} parent=11 // pred_region
          _
        $region20: #{tpu_custom_call.1} parent=11 // pred_fallthru
          _
      $region12: #{tpu_custom_call.1} parent=5 // pred_fallthru
        _
      %p248 = scmp.lt.s32.totalorder %s27, 2
      // Predicated region
      $region21: #{tpu_custom_call.1} parent=5 // pred_check
        %p249 = pneg %p248
      $region22: #{tpu_custom_call.1} parent=5 // pred_check_branch
        %251 = sbr.rel (%p249) target = $region24
      $region23: #{tpu_custom_call.1} parent=5 // pred_region
        // Predicated region
        $region25: #{tpu_custom_call.1} parent=23 // pred_check
          %p252 = pneg %p61
        $region26: #{tpu_custom_call.1} parent=23 // pred_check_branch
          %254 = sbr.rel (%p252) target = $region28
        $region27: #{tpu_custom_call.1} parent=23 // pred_region
          %s255 = sand.u32 %s51, 1
          %s256 = scalar_lea.sflag [#allocation4], %s255
          %s257 = sand.u32 %s51, 1
          %s258 = smul.addr %s257, 8
          %s259 = scalar_lea.vmem [#allocation3], %s258
          %s261 = ssub.s32 128, 128
          %262 = vsyncadd %s256, %s261
          %s263 = sadd.s32 %s35, %s34
          %s264 = smul.addr %s263, 128
          %s265 = scalar_lea.hbm %s0, %s264
          %s267 = sshll.u32 %s259, 4
          %s268 = int_to_ptr.vmem [resolvable:$true] %s267
          %270 = dma.hbm_to_vmem [thread:$0]  %s265, 128, %s268, %s256
        $region28: #{tpu_custom_call.1} parent=23 // pred_fallthru
          _
        // Predicated region
        $region29: #{tpu_custom_call.1} parent=23 // pred_check
          %p271 = pneg %p87
        $region30: #{tpu_custom_call.1} parent=23 // pred_check_branch
          %273 = sbr.rel (%p271) target = $region32
        $region31: #{tpu_custom_call.1} parent=23 // pred_region
          %s274 = sand.u32 %s27, 1
          %s275 = scalar_lea.sflag [#allocation7], %s274
          %s276 = sand.u32 %s77, 1
          %s277 = smul.addr %s276, 128
          %s278 = scalar_lea.vmem [#allocation6], %s277
          %s280 = ssub.s32 2048, 2048
          %281 = vsyncadd %s275, %s280
          %s282 = smul.addr %s34, 16
          %s283 = smul.addr %s282, 128
          %s284 = scalar_lea.hbm %s1, %s283
          %s285 = sshll.u32 %s278, 4
          %s286 = int_to_ptr.vmem [resolvable:$true] %s285
          %291 = dma.hbm_to_vmem [thread:$0]  %s284, 2048, %s286, %s275, 128, 128, 8
        $region32: #{tpu_custom_call.1} parent=23 // pred_fallthru
          _
        // Predicated region
        $region33: #{tpu_custom_call.1} parent=23 // pred_check
          %p292 = pneg %p113
        $region34: #{tpu_custom_call.1} parent=23 // pred_check_branch
          %294 = sbr.rel (%p292) target = $region36
        $region35: #{tpu_custom_call.1} parent=23 // pred_region
          %s295 = sand.u32 %s27, 1
          %s296 = scalar_lea.sflag [#allocation7], %s295
          %s297 = sand.u32 %s103, 1
          %s298 = smul.addr %s297, 128
          %s299 = scalar_lea.vmem [#allocation8], %s298
          %s301 = ssub.s32 2048, 2048
          %302 = vsyncadd %s296, %s301
          %s303 = smul.addr %s34, 16
          %s304 = smul.addr %s303, 128
          %s305 = scalar_lea.hbm %s2, %s304
          %s306 = sshll.u32 %s299, 4
          %s307 = int_to_ptr.vmem [resolvable:$true] %s306
          %312 = dma.hbm_to_vmem [thread:$0]  %s305, 2048, %s307, %s296, 128, 128, 8
        $region36: #{tpu_custom_call.1} parent=23 // pred_fallthru
          _
      $region24: #{tpu_custom_call.1} parent=5 // pred_fallthru
        _
      %p313 = scmp.le.s32.totalorder 1, %s27
      %p314 = scmp.lt.s32.totalorder %s27, 3
      %p315 = pnand %p313, %p314
      %p316 = pneg %p315
      // Predicated region
      $region37: #{tpu_custom_call.1} parent=5 // pred_check
        _
      $region38: #{tpu_custom_call.1} parent=5 // pred_check_branch
        %318 = sbr.rel (%p315) target = $region40
      $region39: #{tpu_custom_call.1} parent=5 // pred_region
        %s319 = ssub.s32 %s27, 1
        %s320 = sand.u32 %s54, 1
        %s321 = scalar_lea.sflag [#allocation4], %s320
        %s322 = sand.u32 %s54, 1
        %s323 = smul.addr %s322, 8
        %s324 = scalar_lea.vmem [#allocation3], %s323
        // Predicated region
        $region41: #{tpu_custom_call.1} parent=39 // pred_check
          %p325 = pneg %p67
        $region42: #{tpu_custom_call.1} parent=39 // pred_check_branch
          %327 = sbr.rel (%p325) target = $region44
        $region43: #{tpu_custom_call.1} parent=39 // pred_region
          %328 = dma.done %s321, 128
        $region44: #{tpu_custom_call.1} parent=39 // pred_fallthru
          _
        %s329 = sand.u32 %s32, 1
        %s330 = scalar_lea.sflag [#allocation7], %s329
        %s331 = sand.u32 %s80, 1
        %s332 = smul.addr %s331, 128
        %s333 = scalar_lea.vmem [#allocation6], %s332
        // Predicated region
        $region45: #{tpu_custom_call.1} parent=39 // pred_check
          %p334 = pneg %p93
        $region46: #{tpu_custom_call.1} parent=39 // pred_check_branch
          %336 = sbr.rel (%p334) target = $region48
        $region47: #{tpu_custom_call.1} parent=39 // pred_region
          %337 = dma.done %s330, 2048
        $region48: #{tpu_custom_call.1} parent=39 // pred_fallthru
          _
        %s338 = sand.u32 %s32, 1
        %s339 = scalar_lea.sflag [#allocation7], %s338
        %s340 = sand.u32 %s106, 1
        %s341 = smul.addr %s340, 128
        %s342 = scalar_lea.vmem [#allocation8], %s341
        // Predicated region
        $region49: #{tpu_custom_call.1} parent=39 // pred_check
          %p343 = pneg %p119
        $region50: #{tpu_custom_call.1} parent=39 // pred_check_branch
          %345 = sbr.rel (%p343) target = $region52
        $region51: #{tpu_custom_call.1} parent=39 // pred_region
          %346 = dma.done %s339, 2048
        $region52: #{tpu_custom_call.1} parent=39 // pred_fallthru
          _
        // Predicated region
        $region53: #{tpu_custom_call.1} parent=39 // pred_check
          %p347 = pneg %p140
        $region54: #{tpu_custom_call.1} parent=39 // pred_check_branch
          %349 = sbr.rel (%p347) target = $region56
        $region55: #{tpu_custom_call.1} parent=39 // pred_region
          %350 = dma.done [#allocation10], 2048
        $region56: #{tpu_custom_call.1} parent=39 // pred_fallthru
          _
        %s351 = sand.u32 %s54, 1
        %s352 = scalar_lea.sflag [#allocation4], %s351
        %s353 = sand.u32 %s54, 1
        %s354 = smul.addr %s353, 8
        %s355 = scalar_lea.vmem [#allocation3], %s354
        %p356 = pneg %p67
        %p357 = pneg %p64
        %s358 = sand.u32 %s32, 1
        %s359 = scalar_lea.sflag [#allocation7], %s358
        %s360 = sand.u32 %s80, 1
        %s361 = smul.addr %s360, 128
        %s362 = scalar_lea.vmem [#allocation6], %s361
        %p363 = pneg %p93
        %p364 = pneg %p90
        %s365 = sand.u32 %s32, 1
        %s366 = scalar_lea.sflag [#allocation7], %s365
        %s367 = sand.u32 %s106, 1
        %s368 = smul.addr %s367, 128
        %s369 = scalar_lea.vmem [#allocation8], %s368
        %p370 = pneg %p119
        %p371 = pneg %p116
        %p372 = pneg %p140
        %p373 = pneg %p137
        %p374 = pneg %p161
        %p375 = pneg %p158
        %p376 = pneg %p189
        %p377 = pneg %p186
        %s378 = sand.u32 %s176, 1
        %s379 = scalar_lea.sflag [#allocation5], %s378
        %s380 = sand.u32 %s176, 1
        %s381 = smul.addr %s380, 8
        %s382 = scalar_lea.vmem [#allocation11], %s381
        %p383 = pneg %p217
        %p384 = pneg %p214
        %s385 = sand.u32 %s204, 1
        %s386 = scalar_lea.sflag [#allocation13], %s385
        %s387 = sand.u32 %s204, 1
        %s388 = smul.addr %s387, 8
        %s389 = scalar_lea.vmem [#allocation12], %s388
        %v390 = vld [vmem:[%s324] sm:$0xff]
        %v391 = vld [vmem:[%s333] sm:$0xff]
        %v392 = vld [vmem:[%s333 + $0x8] sm:$0xff]
        %v393 = vld [vmem:[%s333 + $0x10] sm:$0xff]
        %v394 = vld [vmem:[%s333 + $0x18] sm:$0xff]
        %v395 = vld [vmem:[%s333 + $0x20] sm:$0xff]
        %v396 = vld [vmem:[%s333 + $0x28] sm:$0xff]
        %v397 = vld [vmem:[%s333 + $0x30] sm:$0xff]
        %v398 = vld [vmem:[%s333 + $0x38] sm:$0xff]
        %v399 = vld [vmem:[%s333 + $0x40] sm:$0xff]
        %v400 = vld [vmem:[%s333 + $0x48] sm:$0xff]
        %v401 = vld [vmem:[%s333 + $0x50] sm:$0xff]
        %v402 = vld [vmem:[%s333 + $0x58] sm:$0xff]
        %v403 = vld [vmem:[%s333 + $0x60] sm:$0xff]
        %v404 = vld [vmem:[%s333 + $0x68] sm:$0xff]
        %v405 = vld [vmem:[%s333 + $0x70] sm:$0xff]
        %v406 = vld [vmem:[%s333 + $0x78] sm:$0xff]
        %v407 = vld [vmem:[%s342] sm:$0xff]
        %v408 = vld [vmem:[%s342 + $0x8] sm:$0xff]
        %v409 = vld [vmem:[%s342 + $0x10] sm:$0xff]
        %v410 = vld [vmem:[%s342 + $0x18] sm:$0xff]
        %v411 = vld [vmem:[%s342 + $0x20] sm:$0xff]
        %v412 = vld [vmem:[%s342 + $0x28] sm:$0xff]
        %v413 = vld [vmem:[%s342 + $0x30] sm:$0xff]
        %v414 = vld [vmem:[%s342 + $0x38] sm:$0xff]
        %v415 = vld [vmem:[%s342 + $0x40] sm:$0xff]
        %v416 = vld [vmem:[%s342 + $0x48] sm:$0xff]
        %v417 = vld [vmem:[%s342 + $0x50] sm:$0xff]
        %v418 = vld [vmem:[%s342 + $0x58] sm:$0xff]
        %v419 = vld [vmem:[%s342 + $0x60] sm:$0xff]
        %v420 = vld [vmem:[%s342 + $0x68] sm:$0xff]
        %v421 = vld [vmem:[%s342 + $0x70] sm:$0xff]
        %v422 = vld [vmem:[%s342 + $0x78] sm:$0xff]
        %v423 = vld [vmem:[#allocation9] sm:$0xff]
        %v424 = vld [vmem:[#allocation9 + $0x8] sm:$0xff]
        %v425 = vld [vmem:[#allocation9 + $0x10] sm:$0xff]
        %v426 = vld [vmem:[#allocation9 + $0x18] sm:$0xff]
        %v427 = vld [vmem:[#allocation9 + $0x20] sm:$0xff]
        %v428 = vld [vmem:[#allocation9 + $0x28] sm:$0xff]
        %v429 = vld [vmem:[#allocation9 + $0x30] sm:$0xff]
        %v430 = vld [vmem:[#allocation9 + $0x38] sm:$0xff]
        %v431 = vld [vmem:[#allocation9 + $0x40] sm:$0xff]
        %v432 = vld [vmem:[#allocation9 + $0x48] sm:$0xff]
        %v433 = vld [vmem:[#allocation9 + $0x50] sm:$0xff]
        %v434 = vld [vmem:[#allocation9 + $0x58] sm:$0xff]
        %v435 = vld [vmem:[#allocation9 + $0x60] sm:$0xff]
        %v436 = vld [vmem:[#allocation9 + $0x68] sm:$0xff]
        %v437 = vld [vmem:[#allocation9 + $0x70] sm:$0xff]
        %v438 = vld [vmem:[#allocation9 + $0x78] sm:$0xff]
        %s439 = sld [smem:[#allocation2]]
        %440 = vmatprep.subr.mxu0 0.0
        %441 = vmatpush1.msra.mxu0 %v423
        %442 = vmatprep.subr.mxu0 0.0
        %443 = vmatpush1.msra.mxu0 %v424
        %444 = vmatprep.subr.mxu0 0.0
        %445 = vmatpush1.msra.mxu0 %v425
        %446 = vmatprep.subr.mxu0 0.0
        %447 = vmatpush1.msra.mxu0 %v426
        %448 = vmatprep.subr.mxu0 0.0
        %449 = vmatpush1.msra.mxu0 %v427
        %450 = vmatprep.subr.mxu0 0.0
        %451 = vmatpush1.msra.mxu0 %v428
        %452 = vmatprep.subr.mxu0 0.0
        %453 = vmatpush1.msra.mxu0 %v429
        %454 = vmatprep.subr.mxu0 0.0
        %455 = vmatpush1.msra.mxu0 %v430
        %456 = vmatprep.subr.mxu0 0.0
        %457 = vmatpush1.msra.mxu0 %v431
        %458 = vmatprep.subr.mxu0 0.0
        %459 = vmatpush1.msra.mxu0 %v432
        %460 = vmatprep.subr.mxu0 0.0
        %461 = vmatpush1.msra.mxu0 %v433
        %462 = vmatprep.subr.mxu0 0.0
        %463 = vmatpush1.msra.mxu0 %v434
        %464 = vmatprep.subr.mxu0 0.0
        %465 = vmatpush1.msra.mxu0 %v435
        %466 = vmatprep.subr.mxu0 0.0
        %467 = vmatpush1.msra.mxu0 %v436
        %468 = vmatprep.subr.mxu0 0.0
        %469 = vmatpush1.msra.mxu0 %v437
        %470 = vmatprep.subr.mxu0 0.0
        %471 = vmatpush1.msra.mxu0 %v438
        %472 = vmatprep.subr.mxu0 0.0
        %473 = vmatpush1.msra.mxu0 0.0
        %474 = vmatprep.subr.mxu0 0.0
        %475 = vmatpush1.msra.mxu0 0.0
        %476 = vmatprep.subr.mxu0 0.0
        %477 = vmatpush1.msra.mxu0 0.0
        %478 = vmatprep.subr.mxu0 0.0
        %479 = vmatpush1.msra.mxu0 0.0
        %480 = vmatprep.subr.mxu0 0.0
        %481 = vmatpush1.msra.mxu0 0.0
        %482 = vmatprep.subr.mxu0 0.0
        %483 = vmatpush1.msra.mxu0 0.0
        %484 = vmatprep.subr.mxu0 0.0
        %485 = vmatpush1.msra.mxu0 0.0
        %486 = vmatprep.subr.mxu0 0.0
        %487 = vmatpush1.msra.mxu0 0.0
        %488 = vmatprep.subr.mxu0 0.0
        %489 = vmatpush1.msra.mxu0 0.0
        %490 = vmatprep.subr.mxu0 0.0
        %491 = vmatpush1.msra.mxu0 0.0
        %492 = vmatprep.subr.mxu0 0.0
        %493 = vmatpush1.msra.mxu0 0.0
        %494 = vmatprep.subr.mxu0 0.0
        %495 = vmatpush1.msra.mxu0 0.0
        %496 = vmatprep.subr.mxu0 0.0
        %497 = vmatpush1.msra.mxu0 0.0
        %498 = vmatprep.subr.mxu0 0.0
        %499 = vmatpush1.msra.mxu0 0.0
        %500 = vmatprep.subr.mxu0 0.0
        %501 = vmatpush1.msra.mxu0 0.0
        %502 = vmatprep.subr.mxu0 0.0
        %503 = vmatpush1.msra.mxu0 0.0
        %504 = vmatprep.mubr.f32.mxu0 0.0
        %505 = vmatmul.mubr.f32.gmra.mrb[0].mxu0 %v390
        %v506 = vpop.f32.mrb[0].mxu0
        %v507 = vadd.f32 0.0, %v506
        %v508 = vpop.f32.mrb[0].mxu0
        %509 = vdwg.mxu0
        %v510 = vstv %s439
        %511 = vmatprep.subr.mxu0 0.0
        %512 = vmatpush1.xpose.msra.mxu0 %v391
        %513 = vmatprep.subr.mxu0 0.0
        %514 = vmatpush1.xpose.msra.mxu0 %v392
        %515 = vmatprep.subr.mxu0 0.0
        %516 = vmatpush1.xpose.msra.mxu0 %v393
        %517 = vmatprep.subr.mxu0 0.0
        %518 = vmatpush1.xpose.msra.mxu0 %v394
        %519 = vmatprep.subr.mxu0 0.0
        %520 = vmatpush1.xpose.msra.mxu0 %v395
        %521 = vmatprep.subr.mxu0 0.0
        %522 = vmatpush1.xpose.msra.mxu0 %v396
        %523 = vmatprep.subr.mxu0 0.0
        %524 = vmatpush1.xpose.msra.mxu0 %v397
        %525 = vmatprep.subr.mxu0 0.0
        %526 = vmatpush1.xpose.msra.mxu0 %v398
        %527 = vmatprep.subr.mxu0 0.0
        %528 = vmatpush1.xpose.msra.mxu0 %v399
        %529 = vmatprep.subr.mxu0 0.0
        %530 = vmatpush1.xpose.msra.mxu0 %v400
        %531 = vmatprep.subr.mxu0 0.0
        %532 = vmatpush1.xpose.msra.mxu0 %v401
        %533 = vmatprep.subr.mxu0 0.0
        %534 = vmatpush1.xpose.msra.mxu0 %v402
        %535 = vmatprep.subr.mxu0 0.0
        %536 = vmatpush1.xpose.msra.mxu0 %v403
        %537 = vmatprep.subr.mxu0 0.0
        %538 = vmatpush1.xpose.msra.mxu0 %v404
        %539 = vmatprep.subr.mxu0 0.0
        %540 = vmatpush1.xpose.msra.mxu0 %v405
        %541 = vmatprep.subr.mxu0 0.0
        %542 = vmatpush1.xpose.msra.mxu0 %v406
        %543 = vmatprep.subr.mxu0 0.0
        %544 = vmatpush1.xpose.msra.mxu0 0.0
        %545 = vmatprep.subr.mxu0 0.0
        %546 = vmatpush1.xpose.msra.mxu0 0.0
        %547 = vmatprep.subr.mxu0 0.0
        %548 = vmatpush1.xpose.msra.mxu0 0.0
        %549 = vmatprep.subr.mxu0 0.0
        %550 = vmatpush1.xpose.msra.mxu0 0.0
        %551 = vmatprep.subr.mxu0 0.0
        %552 = vmatpush1.xpose.msra.mxu0 0.0
        %553 = vmatprep.subr.mxu0 0.0
        %554 = vmatpush1.xpose.msra.mxu0 0.0
        %555 = vmatprep.subr.mxu0 0.0
        %556 = vmatpush1.xpose.msra.mxu0 0.0
        %557 = vmatprep.subr.mxu0 0.0
        %558 = vmatpush1.xpose.msra.mxu0 0.0
        %559 = vmatprep.subr.mxu0 0.0
        %560 = vmatpush1.xpose.msra.mxu0 0.0
        %561 = vmatprep.subr.mxu0 0.0
        %562 = vmatpush1.xpose.msra.mxu0 0.0
        %563 = vmatprep.subr.mxu0 0.0
        %564 = vmatpush1.xpose.msra.mxu0 0.0
        %565 = vmatprep.subr.mxu0 0.0
        %566 = vmatpush1.xpose.msra.mxu0 0.0
        %567 = vmatprep.subr.mxu0 0.0
        %568 = vmatpush1.xpose.msra.mxu0 0.0
        %569 = vmatprep.subr.mxu0 0.0
        %570 = vmatpush1.xpose.msra.mxu0 0.0
        %571 = vmatprep.subr.mxu0 0.0
        %572 = vmatpush1.xpose.msra.mxu0 0.0
        %573 = vmatprep.subr.mxu0 0.0
        %574 = vmatpush1.xpose.msra.mxu0 0.0
        %575 = vmatprep.mubr.f32.mxu0 0.0
        %576 = vmatmul.mubr.f32.gmra.mrb[0].mxu0 %v507
        %v577 = vpop.f32.mrb[0].mxu0
        %v578 = vadd.f32 %v510, %v577
        %v579 = vpop.f32.mrb[0].mxu0
        %580 = vdwg.mxu0
        %v581 = vtanh.pop %v578
        %v582 = vmul.f32 %v581, 1.442695
        %v583 = vpow.pop %v582
        %v584 = vlaneseq
        %v585 = vand.u32 %v584, 127
        %vm586 = vcmp.lt.s32.totalorder %v585, 8
        %v587 = vsel %vm586, %v583, 0.0
        %588 = vadd.xlane.f32.xlu0 %v587
        %v589 = vpop.xlane.xlu0 %588
        %v590 = vrcp.pop %v589
        %v591 = vmul.f32 %v589, %v590
        %v592 = vsub.f32 2.0, %v591
        %v593 = vmul.f32 %v590, %v592
        %v594 = vmul.f32 %v587, %v593
        %595 = vst [vmem:[%s382] sm:$0xff] %v594
        %596 = vmatprep.subr.mxu0 0.0
        %597 = vmatpush1.msra.mxu0 %v407
        %598 = vmatprep.subr.mxu0 0.0
        %599 = vmatpush1.msra.mxu0 %v408
        %600 = vmatprep.subr.mxu0 0.0
        %601 = vmatpush1.msra.mxu0 %v409
        %602 = vmatprep.subr.mxu0 0.0
        %603 = vmatpush1.msra.mxu0 %v410
        %604 = vmatprep.subr.mxu0 0.0
        %605 = vmatpush1.msra.mxu0 %v411
        %606 = vmatprep.subr.mxu0 0.0
        %607 = vmatpush1.msra.mxu0 %v412
        %608 = vmatprep.subr.mxu0 0.0
        %609 = vmatpush1.msra.mxu0 %v413
        %610 = vmatprep.subr.mxu0 0.0
        %611 = vmatpush1.msra.mxu0 %v414
        %612 = vmatprep.subr.mxu0 0.0
        %613 = vmatpush1.msra.mxu0 %v415
        %614 = vmatprep.subr.mxu0 0.0
        %615 = vmatpush1.msra.mxu0 %v416
        %616 = vmatprep.subr.mxu0 0.0
        %617 = vmatpush1.msra.mxu0 %v417
        %618 = vmatprep.subr.mxu0 0.0
        %619 = vmatpush1.msra.mxu0 %v418
        %620 = vmatprep.subr.mxu0 0.0
        %621 = vmatpush1.msra.mxu0 %v419
        %622 = vmatprep.subr.mxu0 0.0
        %623 = vmatpush1.msra.mxu0 %v420
        %624 = vmatprep.subr.mxu0 0.0
        %625 = vmatpush1.msra.mxu0 %v421
        %626 = vmatprep.subr.mxu0 0.0
        %627 = vmatpush1.msra.mxu0 %v422
        %628 = vmatprep.subr.mxu0 0.0
        %629 = vmatpush1.msra.mxu0 0.0
        %630 = vmatprep.subr.mxu0 0.0
        %631 = vmatpush1.msra.mxu0 0.0
        %632 = vmatprep.subr.mxu0 0.0
        %633 = vmatpush1.msra.mxu0 0.0
        %634 = vmatprep.subr.mxu0 0.0
        %635 = vmatpush1.msra.mxu0 0.0
        %636 = vmatprep.subr.mxu0 0.0
        %637 = vmatpush1.msra.mxu0 0.0
        %638 = vmatprep.subr.mxu0 0.0
        %639 = vmatpush1.msra.mxu0 0.0
        %640 = vmatprep.subr.mxu0 0.0
        %641 = vmatpush1.msra.mxu0 0.0
        %642 = vmatprep.subr.mxu0 0.0
        %643 = vmatpush1.msra.mxu0 0.0
        %644 = vmatprep.subr.mxu0 0.0
        %645 = vmatpush1.msra.mxu0 0.0
        %646 = vmatprep.subr.mxu0 0.0
        %647 = vmatpush1.msra.mxu0 0.0
        %648 = vmatprep.subr.mxu0 0.0
        %649 = vmatpush1.msra.mxu0 0.0
        %650 = vmatprep.subr.mxu0 0.0
        %651 = vmatpush1.msra.mxu0 0.0
        %652 = vmatprep.subr.mxu0 0.0
        %653 = vmatpush1.msra.mxu0 0.0
        %654 = vmatprep.subr.mxu0 0.0
        %655 = vmatpush1.msra.mxu0 0.0
        %656 = vmatprep.subr.mxu0 0.0
        %657 = vmatpush1.msra.mxu0 0.0
        %658 = vmatprep.subr.mxu0 0.0
        %659 = vmatpush1.msra.mxu0 0.0
        %660 = vmatprep.mubr.f32.mxu0 0.0
        %661 = vmatmul.mubr.f32.gmra.mrb[0].mxu0 %v594
        %v662 = vpop.f32.mrb[0].mxu0
        %v663 = vadd.f32 0.0, %v662
        %v664 = vpop.f32.mrb[0].mxu0
        %665 = vdwg.mxu0
        %666 = vst [vmem:[%s389] sm:$0xff] %v663
        %s667 = sand.u32 %s176, 1
        %s668 = scalar_lea.sflag [#allocation5], %s667
        %s669 = sand.u32 %s176, 1
        %s670 = smul.addr %s669, 8
        %s671 = scalar_lea.vmem [#allocation11], %s670
        %s672 = sand.u32 %s204, 1
        %s673 = scalar_lea.sflag [#allocation13], %s672
        %s674 = sand.u32 %s204, 1
        %s675 = smul.addr %s674, 8
        %s676 = scalar_lea.vmem [#allocation12], %s675
        // Predicated region
        $region57: #{tpu_custom_call.1} parent=39 // pred_check
          %p677 = pneg %p186
        $region58: #{tpu_custom_call.1} parent=39 // pred_check_branch
          %679 = sbr.rel (%p677) target = $region60
        $region59: #{tpu_custom_call.1} parent=39 // pred_region
          %s681 = ssub.s32 128, 128
          %682 = vsyncadd %s668, %s681
          %s683 = sadd.s32 %s37, %s36
          %s684 = smul.addr %s683, 128
          %s685 = scalar_lea.hbm %s5, %s684
          %s687 = sshll.u32 %s671, 4
          %s688 = int_to_ptr.vmem [resolvable:$true] %s687
          %690 = dma.vmem_to_hbm [thread:$0]  %s688, 128, %s685, %s668
        $region60: #{tpu_custom_call.1} parent=39 // pred_fallthru
          _
        // Predicated region
        $region61: #{tpu_custom_call.1} parent=39 // pred_check
          %p691 = pneg %p214
        $region62: #{tpu_custom_call.1} parent=39 // pred_check_branch
          %693 = sbr.rel (%p691) target = $region64
        $region63: #{tpu_custom_call.1} parent=39 // pred_region
          %s695 = ssub.s32 128, 128
          %696 = vsyncadd %s673, %s695
          %s697 = sadd.s32 %s37, %s36
          %s698 = smul.addr %s697, 128
          %s699 = scalar_lea.hbm %s6, %s698
          %s701 = sshll.u32 %s676, 4
          %s702 = int_to_ptr.vmem [resolvable:$true] %s701
          %704 = dma.vmem_to_hbm [thread:$0]  %s702, 128, %s699, %s673
        $region64: #{tpu_custom_call.1} parent=39 // pred_fallthru
          _
      $region40: #{tpu_custom_call.1} parent=5 // pred_fallthru
        _
      %p705 = scmp.le.s32.totalorder 2, %s27
      // Predicated region
      $region65: #{tpu_custom_call.1} parent=5 // pred_check
        %p706 = pneg %p705
      $region66: #{tpu_custom_call.1} parent=5 // pred_check_branch
        %708 = sbr.rel (%p706) target = $region68
      $region67: #{tpu_custom_call.1} parent=5 // pred_region
        %s709 = ssub.s32 %s27, 2
        // Predicated region
        $region69: #{tpu_custom_call.1} parent=67 // pred_check
          %p710 = pneg %p192
        $region70: #{tpu_custom_call.1} parent=67 // pred_check_branch
          %712 = sbr.rel (%p710) target = $region72
        $region71: #{tpu_custom_call.1} parent=67 // pred_region
          %s713 = sand.u32 %s177, 1
          %s714 = scalar_lea.sflag [#allocation5], %s713
          %s715 = sand.u32 %s177, 1
          %s716 = smul.addr %s715, 8
          %s717 = scalar_lea.vmem [#allocation11], %s716
          %718 = dma.done %s714, 128
        $region72: #{tpu_custom_call.1} parent=67 // pred_fallthru
          _
        // Predicated region
        $region73: #{tpu_custom_call.1} parent=67 // pred_check
          %p719 = pneg %p220
        $region74: #{tpu_custom_call.1} parent=67 // pred_check_branch
          %721 = sbr.rel (%p719) target = $region76
        $region75: #{tpu_custom_call.1} parent=67 // pred_region
          %s722 = sand.u32 %s205, 1
          %s723 = scalar_lea.sflag [#allocation13], %s722
          %s724 = sand.u32 %s205, 1
          %s725 = smul.addr %s724, 8
          %s726 = scalar_lea.vmem [#allocation12], %s725
          %727 = dma.done %s723, 128
        $region76: #{tpu_custom_call.1} parent=67 // pred_fallthru
          _
      $region68: #{tpu_custom_call.1} parent=5 // pred_fallthru
        _
    $region6: #{tpu_custom_call.1} parent=1 // loop_footer
      %s31 = sadd.s32 1, %s27
    $region7: #{tpu_custom_call.1} parent=1 // loop_footer_branch
      %26 = sbr.rel target = $region3
    $region8: #{tpu_custom_call.1} parent=1 // loop_exit
      _
    %728 = vsyncpa [#allocation4], 1
    %s729 = scalar_lea.sflag [#allocation4], 1
    %730 = vsyncpa %s729, 1
    %731 = vsyncpa [#allocation7], 1
    %s732 = scalar_lea.sflag [#allocation7], 1
    %733 = vsyncpa %s732, 1
    %734 = vsyncpa [#allocation10], 1
    %735 = vsyncpa [#allocation5], 1
    %s736 = scalar_lea.sflag [#allocation5], 1
    %737 = vsyncpa %s736, 1
    %738 = vsyncpa [#allocation13], 1
    %s739 = scalar_lea.sflag [#allocation13], 1
    %740 = vsyncpa %s739, 1

</llo_original>
